<compile_context>
chip_gen: v7x
topology: tpu7x:2x2x1
jax: 0.10.0
libtpu: 0.0.40
codegen_flags: <defaults>
</compile_context>

<pallas_src>
import functools

import jax
import jax.numpy as jnp
from jax.experimental import pallas as pl
from jax.experimental.pallas import tpu as pltpu


_SLAB_BYTES = 32 * 1024          # f32 working set per input per inner-loop step
_MAX_TILE_ROWS = 16 * 1024


def _sublane_multiple(dtype) -> int:
    itemsize = jnp.dtype(dtype).itemsize
    return {4: 8, 2: 16, 1: 32}.get(itemsize, 8)


def _vmem_capacity_bytes() -> int:
    try:
        info = pltpu.get_tpu_info()
        cap = getattr(info, "vmem_capacity_bytes", None)
        if cap:
            return int(cap)
    except Exception:
        pass
    return 64 * 1024 * 1024      # conservative fallback (v7x per-TC VMEM)


def _plain_abs3_sum(mats):
    """XLA-fused sum_i sum(|mats[i]|^3), f32 accumulation."""
    total = jnp.float32(0.0)
    for m in mats:
        x = m.astype(jnp.float32)
        a = jnp.abs(x)
        total = total + jnp.sum(a * a * a)
    return total


def _make_abs3_kernel(n_inputs, tm, slab_rows, n_cols, npp, num_blocks, phantom):
    """Kernel over n_inputs same-shape (tm, N) tiles, accumulating (8, N)."""
    n_slabs = tm // slab_rows

    def partial_sum(x_refs):
        def body(i, acc):
            start = i * slab_rows
            if not isinstance(start, int):
                start = pl.multiple_of(start, slab_rows)
            for x_ref in x_refs:
                x = x_ref[pl.ds(start, slab_rows), :].astype(jnp.float32)
                a = jnp.abs(x)
                x3 = a * a * a                                 # 2 VPU muls, no pow
                # Major-axis fold onto (8, N): pure VPU vreg adds.
                acc = acc + jnp.sum(
                    x3.reshape(slab_rows // 8, 8, n_cols), axis=0)
            return acc

        acc0 = jnp.zeros((8, n_cols), jnp.float32)
        if n_slabs <= 8:
            acc = acc0
            for i in range(n_slabs):
                acc = body(i, acc)
            return acc
        return jax.lax.fori_loop(0, n_slabs, body, acc0)

    def kernel(*refs):
        x_refs = refs[:n_inputs]
        o_ref = refs[n_inputs]

        # Output block index constant along the reduction axis -> resident acc.
        @pl.when(pl.program_id(1) == 0)
        def _():
            o_ref[...] = jnp.zeros_like(o_ref)

        if phantom:
            blk = pl.program_id(0) * npp + pl.program_id(1)

            @pl.when(blk < num_blocks)
            def _():
                o_ref[...] += partial_sum(x_refs)
        else:
            o_ref[...] += partial_sum(x_refs)

    return kernel


def _abs3_group_sum(mats, *, min_pallas_bytes, tile_rows):
    """sum_i sum(|mats[i]|^3) for a list of same-shape 2-D arrays (f32 scalar)."""
    M, N = mats[0].shape
    n = len(mats)
    dtype = mats[0].dtype
    dbytes = jnp.dtype(dtype).itemsize
    sub = _sublane_multiple(dtype)

    total_bytes = n * M * N * dbytes
    tm_cap = (M // sub) * sub

    # Small-input fast path: pallas dispatch + pipeline prime costs several us,
    # so for sub-MiB groups the XLA-fused reduction is strictly faster.
    if total_bytes < min_pallas_bytes or tm_cap == 0:
        return _plain_abs3_sum(mats)

    # Generation-aware VMEM budget for the double-buffered input working set.
    vmem_cap = _vmem_capacity_bytes()
    budget_bytes = max(4 * 1024 * 1024, (vmem_cap * 3) // 8)
    vmem_limit = int(min(vmem_cap - 8 * 1024 * 1024,
                         budget_bytes + 12 * 1024 * 1024))

    if tile_rows is not None:
        tm = max(sub, (int(tile_rows) // sub) * sub)
    else:
        per_block_bytes = max(sub * N * dbytes, budget_bytes // (2 * n))
        tm = max(sub, (per_block_bytes // (N * dbytes)) // sub * sub)
    tm = min(tm, tm_cap, _MAX_TILE_ROWS)

    # Streaming-fold granularity; make tm an exact multiple of the slab.
    slab_rows = max(sub, min(tm, (_SLAB_BYTES // (N * 4)) // sub * sub))
    tm = max(slab_rows, (tm // slab_rows) * slab_rows)

    num_blocks = M // tm
    main_rows = num_blocks * tm
    tail_rows = M - main_rows

    # Split row blocks across 2 TensorCores whenever possible (v7x megacore).
    # Odd block counts get a clamped index_map + skipped phantom block.
    P = 2 if num_blocks >= 2 else 1
    npp = pl.cdiv(num_blocks, P)
    phantom = (P * npp) > num_blocks
    last_blk = num_blocks - 1

    def in_map(c, r):
        blk = c * npp + r
        if phantom:
            blk = jnp.minimum(blk, last_blk)   # keep the DMA in bounds
        return (blk, 0)

    in_specs = [pl.BlockSpec((tm, N), in_map) for _ in range(n)]
    out_spec = pl.BlockSpec((8, N), lambda c, r: (c, 0))

    kernel = _make_abs3_kernel(n, tm, slab_rows, N, npp, num_blocks, phantom)

    main_elems = n * main_rows * N
    cost = pl.CostEstimate(
        flops=4 * main_elems,                    # abs + 2 muls + accumulate
        transcendentals=0,
        bytes_accessed=main_elems * dbytes + P * 8 * N * 4,
    )

    partials = pl.pallas_call(
        kernel,
        out_shape=jax.ShapeDtypeStruct((P * 8, N), jnp.float32),
        grid_spec=pltpu.PrefetchScalarGridSpec(
            num_scalar_prefetch=0,
            grid=(P, npp),
            in_specs=in_specs,
            out_specs=out_spec,
        ),
        compiler_params=pltpu.CompilerParams(
            dimension_semantics=("parallel", "arbitrary"),
            vmem_limit_bytes=vmem_limit,
        ),
        cost_estimate=cost,
    )(*mats)

    total = jnp.sum(partials)      # single cheap cross-lane reduce, fused by XLA

    # Tail rows (< tm) handled in plain JAX -> hot kernel loop stays mask-free.
    if tail_rows > 0:
        total = total + _plain_abs3_sum([m[main_rows:] for m in mats])
    return total


@functools.partial(jax.jit, static_argnames=("min_pallas_bytes", "tile_rows"))
def _n3_impl(factors, weight, min_pallas_bytes, tile_rows):
    # Group factors by flattened 2-D shape & dtype; each group -> one fused call.
    groups = {}
    for f in factors:
        f2d = jnp.reshape(f, (f.shape[0], -1))
        key = (f2d.shape, jnp.dtype(f2d.dtype).name)
        groups.setdefault(key, []).append(f2d)

    total = jnp.float32(0.0)
    for mats in groups.values():
        total = total + _abs3_group_sum(
            mats, min_pallas_bytes=min_pallas_bytes, tile_rows=tile_rows)

    # weight is common to all factors in N3, so factor it out of the sum.
    return (weight * total) / jnp.float32(factors[0].shape[0])


def n3_regularizer(factors, weight, *, min_pallas_bytes=1 << 20, tile_rows=None):
    """JAX/Pallas equivalent of N3.forward(factors)."""
    return _n3_impl(tuple(factors), jnp.float32(weight),
                    min_pallas_bytes=int(min_pallas_bytes), tile_rows=tile_rows)


def _reference(factors, weight: float) -> jax.Array:
    norm = jnp.float32(0.0)
    for f in factors:
        norm = norm + jnp.float32(weight) * jnp.sum(
            jnp.abs(f.astype(jnp.float32)) ** 3)
    return norm / jnp.float32(factors[0].shape[0])


if __name__ == "__main__":
    key = jax.random.PRNGKey(0)
    k1, k2, k3 = jax.random.split(key, 3)
    weight = 0.05

    # (1) Pallas path, forced small tile: 220 rows / tile 64 -> 3 blocks (odd),
    #     exercising the 2-core split with a phantom block and the 28-row
    #     JAX-side tail.
    batch, rank = 220, 128
    factors = (
        jax.random.normal(k1, (batch, rank), dtype=jnp.float32),
        jax.random.normal(k2, (batch, rank), dtype=jnp.float32),
        jax.random.normal(k3, (batch, rank), dtype=jnp.float32),
    )
    out = jax.block_until_ready(
        n3_regularizer(factors, weight, min_pallas_bytes=0, tile_rows=64))
    ref = _reference(factors, weight)
    assert jnp.allclose(out, ref, rtol=1e-4, atol=1e-4), (out, ref)

    # (2) Pallas path with default (budget-driven) tiling and the streaming
    #     inner fold (fori_loop over 64-row slabs of a single 1152-row block).
    big = tuple(jnp.tile(f, (6, 1))[:1152] for f in factors)
    out = jax.block_until_ready(n3_regularizer(big, weight))
    ref = _reference(big, weight)
    assert jnp.allclose(out, ref, rtol=1e-4, atol=1e-4), (out, ref)

    # (3) Tiny input -> small-input fast path (no pallas_call at all).
    small = tuple(f[:12] for f in factors)
    out = jax.block_until_ready(n3_regularizer(small, weight))
    ref = _reference(small, weight)
    assert jnp.allclose(out, ref, rtol=1e-5, atol=1e-5), (out, ref)

    print("KERNEL_OK")
</pallas_src>

<mosaic_0001>
module attributes {stable_mosaic.version = 11 : i64} {
  func.func @kernel(%arg0: i32, %arg1: i32, %arg2: memref<64x128xf32, #tpu.memory_space<vmem>>, %arg3: memref<64x128xf32, #tpu.memory_space<vmem>>, %arg4: memref<64x128xf32, #tpu.memory_space<vmem>>, %arg5: memref<8x128xf32, #tpu.memory_space<vmem>>) attributes {dimension_semantics = [#tpu.dimension_semantics<parallel>, #tpu.dimension_semantics<arbitrary>], iteration_bounds = array<i64: 2, 2>, scalar_prefetch = 0 : i64, scratch_operands = 0 : i64, tpu.core_type = #tpu.core_type<tc>, window_params = [{transform_indices = @transform_0, window_bounds = array<i64: 64, 128>}, {transform_indices = @transform_1, window_bounds = array<i64: 64, 128>}, {transform_indices = @transform_2, window_bounds = array<i64: 64, 128>}, {transform_indices = @transform_3, window_bounds = array<i64: 8, 128>}]} {
    %c0_i32 = arith.constant 0 : i32
    %0 = arith.cmpi eq, %arg1, %c0_i32 : i32
    %1 = arith.extui %0 : i1 to i32
    %c0_i32_0 = arith.constant 0 : i32
    %2 = arith.cmpi ne, %1, %c0_i32_0 : i32
    scf.if %2 {
      %cst = arith.constant 0.000000e+00 : f32
      %8 = vector.broadcast %cst : f32 to vector<8x128xf32>
      %c0 = arith.constant 0 : index
      %c0_2 = arith.constant 0 : index
      %9 = vector.load %arg5[%c0, %c0_2] : memref<8x128xf32, #tpu.memory_space<vmem>>, vector<8x128xf32>
      tpu.vector_store %arg5[%c0, %c0_2], %8 {strides = array<i32>} : memref<8x128xf32, #tpu.memory_space<vmem>>, vector<8x128xf32>,
    } else {
    }
    %c2_i32 = arith.constant 2 : i32
    %3 = arith.muli %arg0, %c2_i32 : i32
    %4 = arith.addi %3, %arg1 : i32
    %c3_i32 = arith.constant 3 : i32
    %5 = arith.cmpi slt, %4, %c3_i32 : i32
    %6 = arith.extui %5 : i1 to i32
    %c0_i32_1 = arith.constant 0 : i32
    %7 = arith.cmpi ne, %6, %c0_i32_1 : i32
    scf.if %7 {
      %c0 = arith.constant 0 : index
      %c0_2 = arith.constant 0 : index
      %8 = vector.load %arg5[%c0, %c0_2] : memref<8x128xf32, #tpu.memory_space<vmem>>, vector<8x128xf32>
      %cst = arith.constant 0.000000e+00 : f32
      %9 = vector.broadcast %cst : f32 to vector<8x128xf32>
      %c0_3 = arith.constant 0 : index
      %c0_4 = arith.constant 0 : index
      %10 = vector.load %arg2[%c0_3, %c0_4] : memref<64x128xf32, #tpu.memory_space<vmem>>, vector<64x128xf32>
      %11 = math.absf %10 : vector<64x128xf32>
      %12 = arith.mulf %11, %11 : vector<64x128xf32>
      %13 = arith.mulf %12, %11 : vector<64x128xf32>
      %14 = vector.shape_cast %13 : vector<64x128xf32> to vector<8x8x128xf32>
      %cst_5 = arith.constant dense<0.000000e+00> : vector<8x128xf32>
      %15 = vector.multi_reduction <add>, %14, %cst_5 [0] : vector<8x8x128xf32> to vector<8x128xf32>
      %16 = arith.addf %9, %15 : vector<8x128xf32>
      %c0_6 = arith.constant 0 : index
      %c0_7 = arith.constant 0 : index
      %17 = vector.load %arg3[%c0_6, %c0_7] : memref<64x128xf32, #tpu.memory_space<vmem>>, vector<64x128xf32>
      %18 = math.absf %17 : vector<64x128xf32>
      %19 = arith.mulf %18, %18 : vector<64x128xf32>
      %20 = arith.mulf %19, %18 : vector<64x128xf32>
      %21 = vector.shape_cast %20 : vector<64x128xf32> to vector<8x8x128xf32>
      %cst_8 = arith.constant dense<0.000000e+00> : vector<8x128xf32>
      %22 = vector.multi_reduction <add>, %21, %cst_8 [0] : vector<8x8x128xf32> to vector<8x128xf32>
      %23 = arith.addf %16, %22 : vector<8x128xf32>
      %c0_9 = arith.constant 0 : index
      %c0_10 = arith.constant 0 : index
      %24 = vector.load %arg4[%c0_9, %c0_10] : memref<64x128xf32, #tpu.memory_space<vmem>>, vector<64x128xf32>
      %25 = math.absf %24 : vector<64x128xf32>
      %26 = arith.mulf %25, %25 : vector<64x128xf32>
      %27 = arith.mulf %26, %25 : vector<64x128xf32>
      %28 = vector.shape_cast %27 : vector<64x128xf32> to vector<8x8x128xf32>
      %cst_11 = arith.constant dense<0.000000e+00> : vector<8x128xf32>
      %29 = vector.multi_reduction <add>, %28, %cst_11 [0] : vector<8x8x128xf32> to vector<8x128xf32>
      %30 = arith.addf %23, %29 : vector<8x128xf32>
      %31 = arith.addf %8, %30 : vector<8x128xf32>
      %c0_12 = arith.constant 0 : index
      %c0_13 = arith.constant 0 : index
      %32 = vector.load %arg5[%c0_12, %c0_13] : memref<8x128xf32, #tpu.memory_space<vmem>>, vector<8x128xf32>
      tpu.vector_store %arg5[%c0_12, %c0_13], %31 {strides = array<i32>} : memref<8x128xf32, #tpu.memory_space<vmem>>, vector<8x128xf32>,
    } else {
    }
    return
  }
  func.func @transform_0(%arg0: i32, %arg1: i32) -> (i32, i32) {
    %c2_i32 = arith.constant 2 : i32
    %0 = arith.muli %arg0, %c2_i32 : i32
    %1 = arith.addi %0, %arg1 : i32
    %c2_i32_0 = arith.constant 2 : i32
    %2 = arith.minsi %1, %c2_i32_0 : i32
    %c0_i32 = arith.constant 0 : i32
    %c0_i32_1 = arith.constant 0 : i32
    return %2, %c0_i32 : i32, i32
  }
  func.func @transform_1(%arg0: i32, %arg1: i32) -> (i32, i32) {
    %c2_i32 = arith.constant 2 : i32
    %0 = arith.muli %arg0, %c2_i32 : i32
    %1 = arith.addi %0, %arg1 : i32
    %c2_i32_0 = arith.constant 2 : i32
    %2 = arith.minsi %1, %c2_i32_0 : i32
    %c0_i32 = arith.constant 0 : i32
    %c0_i32_1 = arith.constant 0 : i32
    return %2, %c0_i32 : i32, i32
  }
  func.func @transform_2(%arg0: i32, %arg1: i32) -> (i32, i32) {
    %c2_i32 = arith.constant 2 : i32
    %0 = arith.muli %arg0, %c2_i32 : i32
    %1 = arith.addi %0, %arg1 : i32
    %c2_i32_0 = arith.constant 2 : i32
    %2 = arith.minsi %1, %c2_i32_0 : i32
    %c0_i32 = arith.constant 0 : i32
    %c0_i32_1 = arith.constant 0 : i32
    return %2, %c0_i32 : i32, i32
  }
  func.func @transform_3(%arg0: i32, %arg1: i32) -> (i32, i32) {
    %c0_i32 = arith.constant 0 : i32
    %c0_i32_0 = arith.constant 0 : i32
    return %arg0, %c0_i32 : i32, i32
  }
}

</mosaic_0001>

<llo_original>
// kernel: _n3_impl.1
$region0: #{_n3_impl.1}
  #allocation0 [shape = 'u32[]', space=smem, size = 0x4, offset = 0x4, fixed_abs, tag = 'smem constant byte address 0x4 - core index']
  #allocation1 [shape = 'u32[144,128]{1,0:T(1,128)}', space=vmem, size = 0x12000, scoped, tag = 'internal scratch']
  %s0 = inlined_call_operand.hbm [shape: f32[220,128], index: 0, kind: input, shape index: {}]
  %s1 = inlined_call_operand.hbm [shape: f32[220,128], index: 1, kind: input, shape index: {}]
  %s2 = inlined_call_operand.hbm [shape: f32[220,128], index: 2, kind: input, shape index: {}]
  %s3 = inlined_call_operand.vmem [shape: f32[16,128], index: 3, kind: output, shape index: {}]
  %s4 = sld [smem:[#allocation0]]
  $region65: #{_n3_impl.1} parent=0
    _
  %s6 = ssub.s32 1, %s4
  %s7 = scalar_select 0, %s6, %s4
  $region1: #{_n3_impl.1} parent=0
    #allocation2 [shape = 'u8[65536]{0}', space=vmem, size = 0x10000, scoped, tag = 'input window, operand 0']
    #allocation3 [shape = 's32[2]{0}', space=sflag, size = 0x8, scoped, tag = 'scoped memory for _n3_impl.1']
    #allocation4 [shape = 'u8[65536]{0}', space=vmem, size = 0x10000, scoped, tag = 'input window, operand 1']
    #allocation5 [shape = 's32[2]{0}', space=sflag, size = 0x8, scoped, tag = 'scoped memory for _n3_impl.1']
    #allocation6 [shape = 'u8[65536]{0}', space=vmem, size = 0x10000, scoped, tag = 'input window, operand 2']
    %8 = vsyncpa [#allocation3], 0
    %s9 = scalar_lea.sflag [#allocation3], 1
    %10 = vsyncpa %s9, 0
    %11 = vsyncpa [#allocation5], 0
    %s12 = scalar_lea.sflag [#allocation5], 1
    %13 = vsyncpa %s12, 0
    loop: start=0, step=1, limit=6
    $region2: #{_n3_impl.1} parent=1 // loop_pre_header
      _
    $region3: #{_n3_impl.1} parent=1 // loop_header
      %s15 = sphi 0, %s19
      %p16 = scmp.ge.s32.totalorder %s15, 6
      %s22 = sphi 0, %s34
      %s23 = sphi 0, %s30
      %s24 = sphi 0, %s22
      %s25 = sphi 0, %s23
      %s26 = sphi 0, %s24
      %s27 = sphi 0, %s25
      %s45 = sphi 0, %s47
      %s48 = sphi 0, %s45
      %s49 = sphi 0, %s48
      %s65 = sphi 0, %s49
      %s79 = sphi 0, %s81
      %s82 = sphi 0, %s79
      %s83 = sphi 0, %s82
      %s99 = sphi 0, %s83
      %s113 = sphi 0, %s115
      %s116 = sphi 0, %s113
      %s117 = sphi 0, %s116
      %s133 = sphi 0, %s117
      %s139 = sphi 0, %s141
      %s142 = sphi 0, %s139
      %s143 = sphi 0, %s142
      %s159 = sphi 0, %s143
    $region4: #{_n3_impl.1} parent=1 // loop_header_branch
      %18 = sbr.rel (%p16) target = $region8
    $region5: #{_n3_impl.1} parent=1 // loop_body
      %s20 = ssub.s32 %s15, 1
      %s21 = ssub.s32 %s15, 2
      %s28 = sadd.s32 1, %s23
      %p29 = scmp.ge.s32.totalorder %s28, 2
      %s30 = scalar_select %p29, 0, %s28
      %s31 = sadd.s32 1, %s22
      %s32 = scalar_select %p29, %s31, %s22
      %p33 = scmp.ge.s32.totalorder %s32, 2
      %s34 = scalar_select %p33, 0, %s32
      %s35 = smul.u32 %s22, 2
      %s36 = sadd.s32 %s35, %s23
      %p37 = scmp.lt.s32.totalorder %s36, 2
      %s38 = scalar_select %p37, %s36, 2
      %s39 = smul.u32 %s34, 2
      %s40 = sadd.s32 %s39, %s30
      %p41 = scmp.lt.s32.totalorder %s40, 2
      %s42 = scalar_select %p41, %s40, 2
      %s43 = ssub.s32 %s38, %s42
      %p44 = scmp.eq.s32.totalorder %s43, 0
      %s46 = sadd.s32 %s45, 1
      %s47 = scalar_select %p44, %s45, %s46
      %p50 = pneg %p44
      %p51 = scmp.eq.s32.totalorder %s15, 3
      %p52 = por %p50, %p51
      %p53 = scmp.ne.s32.totalorder %s45, %s48
      %p54 = scmp.eq.s32.totalorder %s15, 0
      %p55 = por %p53, %p54
      %p56 = scmp.ne.s32.totalorder %s45, %s48
      %p57 = scmp.eq.s32.totalorder %s20, 3
      %p58 = por %p56, %p57
      %p59 = scmp.ne.s32.totalorder %s48, %s49
      %p60 = scmp.eq.s32.totalorder %s20, 0
      %p61 = por %p59, %p60
      %p62 = scmp.ne.s32.totalorder %s48, %s49
      %p63 = scmp.eq.s32.totalorder %s21, 3
      %p64 = por %p62, %p63
      %p66 = scmp.ne.s32.totalorder %s49, %s65
      %p67 = scmp.eq.s32.totalorder %s21, 0
      %p68 = por %p66, %p67
      %s69 = smul.u32 %s22, 2
      %s70 = sadd.s32 %s69, %s23
      %p71 = scmp.lt.s32.totalorder %s70, 2
      %s72 = scalar_select %p71, %s70, 2
      %s73 = smul.u32 %s34, 2
      %s74 = sadd.s32 %s73, %s30
      %p75 = scmp.lt.s32.totalorder %s74, 2
      %s76 = scalar_select %p75, %s74, 2
      %s77 = ssub.s32 %s72, %s76
      %p78 = scmp.eq.s32.totalorder %s77, 0
      %s80 = sadd.s32 %s79, 1
      %s81 = scalar_select %p78, %s79, %s80
      %p84 = pneg %p78
      %p85 = scmp.eq.s32.totalorder %s15, 3
      %p86 = por %p84, %p85
      %p87 = scmp.ne.s32.totalorder %s79, %s82
      %p88 = scmp.eq.s32.totalorder %s15, 0
      %p89 = por %p87, %p88
      %p90 = scmp.ne.s32.totalorder %s79, %s82
      %p91 = scmp.eq.s32.totalorder %s20, 3
      %p92 = por %p90, %p91
      %p93 = scmp.ne.s32.totalorder %s82, %s83
      %p94 = scmp.eq.s32.totalorder %s20, 0
      %p95 = por %p93, %p94
      %p96 = scmp.ne.s32.totalorder %s82, %s83
      %p97 = scmp.eq.s32.totalorder %s21, 3
      %p98 = por %p96, %p97
      %p100 = scmp.ne.s32.totalorder %s83, %s99
      %p101 = scmp.eq.s32.totalorder %s21, 0
      %p102 = por %p100, %p101
      %s103 = smul.u32 %s22, 2
      %s104 = sadd.s32 %s103, %s23
      %p105 = scmp.lt.s32.totalorder %s104, 2
      %s106 = scalar_select %p105, %s104, 2
      %s107 = smul.u32 %s34, 2
      %s108 = sadd.s32 %s107, %s30
      %p109 = scmp.lt.s32.totalorder %s108, 2
      %s110 = scalar_select %p109, %s108, 2
      %s111 = ssub.s32 %s106, %s110
      %p112 = scmp.eq.s32.totalorder %s111, 0
      %s114 = sadd.s32 %s113, 1
      %s115 = scalar_select %p112, %s113, %s114
      %p118 = pneg %p112
      %p119 = scmp.eq.s32.totalorder %s15, 3
      %p120 = por %p118, %p119
      %p121 = scmp.ne.s32.totalorder %s113, %s116
      %p122 = scmp.eq.s32.totalorder %s15, 0
      %p123 = por %p121, %p122
      %p124 = scmp.ne.s32.totalorder %s113, %s116
      %p125 = scmp.eq.s32.totalorder %s20, 3
      %p126 = por %p124, %p125
      %p127 = scmp.ne.s32.totalorder %s116, %s117
      %p128 = scmp.eq.s32.totalorder %s20, 0
      %p129 = por %p127, %p128
      %p130 = scmp.ne.s32.totalorder %s116, %s117
      %p131 = scmp.eq.s32.totalorder %s21, 3
      %p132 = por %p130, %p131
      %p134 = scmp.ne.s32.totalorder %s117, %s133
      %p135 = scmp.eq.s32.totalorder %s21, 0
      %p136 = por %p134, %p135
      %s137 = ssub.s32 %s22, %s34
      %p138 = scmp.eq.s32.totalorder %s137, 0
      %s140 = sadd.s32 %s139, 1
      %s141 = scalar_select %p138, %s139, %s140
      %p144 = pneg %p138
      %p145 = scmp.eq.s32.totalorder %s15, 3
      %p146 = por %p144, %p145
      %p147 = scmp.ne.s32.totalorder %s139, %s142
      %p148 = scmp.eq.s32.totalorder %s15, 0
      %p149 = por %p147, %p148
      %p150 = scmp.ne.s32.totalorder %s139, %s142
      %p151 = scmp.eq.s32.totalorder %s20, 3
      %p152 = por %p150, %p151
      %p153 = scmp.ne.s32.totalorder %s142, %s143
      %p154 = scmp.eq.s32.totalorder %s20, 0
      %p155 = por %p153, %p154
      %p156 = scmp.ne.s32.totalorder %s142, %s143
      %p157 = scmp.eq.s32.totalorder %s21, 3
      %p158 = por %p156, %p157
      %p160 = scmp.ne.s32.totalorder %s143, %s159
      %p161 = scmp.eq.s32.totalorder %s21, 0
      %p162 = por %p160, %p161
      %p163 = scmp.le.s32.totalorder 1, %s15
      %p164 = scmp.lt.s32.totalorder %s15, 5
      %p165 = pnand %p163, %p164
      %p166 = pneg %p165
      // Predicated region
      $region9: #{_n3_impl.1} parent=5 // pred_check
        _
      $region10: #{_n3_impl.1} parent=5 // pred_check_branch
        %168 = sbr.rel (%p165) target = $region12
      $region11: #{_n3_impl.1} parent=5 // pred_region
        %s169 = ssub.s32 %s15, 1
      $region12: #{_n3_impl.1} parent=5 // pred_fallthru
        _
      %p170 = scmp.lt.s32.totalorder %s15, 4
      // Predicated region
      $region13: #{_n3_impl.1} parent=5 // pred_check
        %p171 = pneg %p170
      $region14: #{_n3_impl.1} parent=5 // pred_check_branch
        %173 = sbr.rel (%p171) target = $region16
      $region15: #{_n3_impl.1} parent=5 // pred_region
        // Predicated region
        $region17: #{_n3_impl.1} parent=15 // pred_check
          %p174 = pneg %p55
        $region18: #{_n3_impl.1} parent=15 // pred_check_branch
          %176 = sbr.rel (%p174) target = $region20
        $region19: #{_n3_impl.1} parent=15 // pred_region
          %s177 = sand.u32 %s45, 1
          %s178 = scalar_lea.sflag [#allocation3], %s177
          %s179 = sand.u32 %s45, 1
          %s180 = smul.addr %s179, 64
          %s181 = scalar_lea.vmem [#allocation2], %s180
          %s182 = smul.u32 %s22, 2
          %s183 = sadd.s32 %s182, %s23
          %p184 = scmp.lt.s32.totalorder %s183, 2
          %s185 = scalar_select %p184, %s183, 2
          %s186 = smul.u32 8, %s185
          %s187 = ssub.s32 28, %s186
          %p188 = scmp.lt.s32.totalorder %s187, 8
          %s189 = scalar_select %p188, %s187, 8
          %s190 = smul.u32 128, %s189
          %s192 = ssub.s32 1024, %s190
          %193 = vsyncadd %s178, %s192
          %p194 = scmp.ne.s32.totalorder 0, %s190
          %s195 = smul.addr %s186, 128
          %s196 = scalar_lea.hbm %s0, %s195
          %s197 = smul.u32 8, %s189
          %s198 = sshll.u32 %s181, 4
          %s199 = int_to_ptr.vmem [resolvable:$true] %s198
          %s200 = sshll.u32 %s197, 4
          %204 = dma.hbm_to_vmem [thread:$0]  (%p194), %s196, %s200, %s199, %s178, 128, 128, 8
        $region20: #{_n3_impl.1} parent=15 // pred_fallthru
          _
        // Predicated region
        $region21: #{_n3_impl.1} parent=15 // pred_check
          %p205 = pneg %p89
        $region22: #{_n3_impl.1} parent=15 // pred_check_branch
          %207 = sbr.rel (%p205) target = $region24
        $region23: #{_n3_impl.1} parent=15 // pred_region
          %s208 = sand.u32 %s15, 1
          %s209 = scalar_lea.sflag [#allocation5], %s208
          %s210 = sand.u32 %s79, 1
          %s211 = smul.addr %s210, 64
          %s212 = scalar_lea.vmem [#allocation4], %s211
          %s213 = smul.u32 %s22, 2
          %s214 = sadd.s32 %s213, %s23
          %p215 = scmp.lt.s32.totalorder %s214, 2
          %s216 = scalar_select %p215, %s214, 2
          %s217 = smul.u32 8, %s216
          %s218 = ssub.s32 28, %s217
          %p219 = scmp.lt.s32.totalorder %s218, 8
          %s220 = scalar_select %p219, %s218, 8
          %s221 = smul.u32 128, %s220
          %s223 = ssub.s32 1024, %s221
          %224 = vsyncadd %s209, %s223
          %p225 = scmp.ne.s32.totalorder 0, %s221
          %s226 = smul.addr %s217, 128
          %s227 = scalar_lea.hbm %s1, %s226
          %s228 = smul.u32 8, %s220
          %s229 = sshll.u32 %s212, 4
          %s230 = int_to_ptr.vmem [resolvable:$true] %s229
          %s231 = sshll.u32 %s228, 4
          %235 = dma.hbm_to_vmem [thread:$0]  (%p225), %s227, %s231, %s230, %s209, 128, 128, 8
        $region24: #{_n3_impl.1} parent=15 // pred_fallthru
          _
        // Predicated region
        $region25: #{_n3_impl.1} parent=15 // pred_check
          %p236 = pneg %p123
        $region26: #{_n3_impl.1} parent=15 // pred_check_branch
          %238 = sbr.rel (%p236) target = $region28
        $region27: #{_n3_impl.1} parent=15 // pred_region
          %s239 = sand.u32 %s15, 1
          %s240 = scalar_lea.sflag [#allocation5], %s239
          %s241 = sand.u32 %s113, 1
          %s242 = smul.addr %s241, 64
          %s243 = scalar_lea.vmem [#allocation6], %s242
          %s244 = smul.u32 %s22, 2
          %s245 = sadd.s32 %s244, %s23
          %p246 = scmp.lt.s32.totalorder %s245, 2
          %s247 = scalar_select %p246, %s245, 2
          %s248 = smul.u32 8, %s247
          %s249 = ssub.s32 28, %s248
          %p250 = scmp.lt.s32.totalorder %s249, 8
          %s251 = scalar_select %p250, %s249, 8
          %s252 = smul.u32 128, %s251
          %s254 = ssub.s32 1024, %s252
          %255 = vsyncadd %s240, %s254
          %p256 = scmp.ne.s32.totalorder 0, %s252
          %s257 = smul.addr %s248, 128
          %s258 = scalar_lea.hbm %s2, %s257
          %s259 = smul.u32 8, %s251
          %s260 = sshll.u32 %s243, 4
          %s261 = int_to_ptr.vmem [resolvable:$true] %s260
          %s262 = sshll.u32 %s259, 4
          %266 = dma.hbm_to_vmem [thread:$0]  (%p256), %s258, %s262, %s261, %s240, 128, 128, 8
        $region28: #{_n3_impl.1} parent=15 // pred_fallthru
          _
      $region16: #{_n3_impl.1} parent=5 // pred_fallthru
        _
      %p267 = scmp.le.s32.totalorder 1, %s15
      %p268 = scmp.lt.s32.totalorder %s15, 5
      %p269 = pnand %p267, %p268
      %p270 = pneg %p269
      // Predicated region
      $region29: #{_n3_impl.1} parent=5 // pred_check
        _
      $region30: #{_n3_impl.1} parent=5 // pred_check_branch
        %272 = sbr.rel (%p269) target = $region32
      $region31: #{_n3_impl.1} parent=5 // pred_region
        %s273 = ssub.s32 %s15, 1
        %s274 = sand.u32 %s48, 1
        %s275 = scalar_lea.sflag [#allocation3], %s274
        %s276 = sand.u32 %s48, 1
        %s277 = smul.addr %s276, 64
        %s278 = scalar_lea.vmem [#allocation2], %s277
        // Predicated region
        $region33: #{_n3_impl.1} parent=31 // pred_check
          %p279 = pneg %p61
        $region34: #{_n3_impl.1} parent=31 // pred_check_branch
          %281 = sbr.rel (%p279) target = $region36
        $region35: #{_n3_impl.1} parent=31 // pred_region
          %282 = dma.done %s275, 1024
        $region36: #{_n3_impl.1} parent=31 // pred_fallthru
          _
        %s283 = sand.u32 %s20, 1
        %s284 = scalar_lea.sflag [#allocation5], %s283
        %s285 = sand.u32 %s82, 1
        %s286 = smul.addr %s285, 64
        %s287 = scalar_lea.vmem [#allocation4], %s286
        // Predicated region
        $region37: #{_n3_impl.1} parent=31 // pred_check
          %p288 = pneg %p95
        $region38: #{_n3_impl.1} parent=31 // pred_check_branch
          %290 = sbr.rel (%p288) target = $region40
        $region39: #{_n3_impl.1} parent=31 // pred_region
          %291 = dma.done %s284, 1024
        $region40: #{_n3_impl.1} parent=31 // pred_fallthru
          _
        %s292 = sand.u32 %s20, 1
        %s293 = scalar_lea.sflag [#allocation5], %s292
        %s294 = sand.u32 %s116, 1
        %s295 = smul.addr %s294, 64
        %s296 = scalar_lea.vmem [#allocation6], %s295
        // Predicated region
        $region41: #{_n3_impl.1} parent=31 // pred_check
          %p297 = pneg %p129
        $region42: #{_n3_impl.1} parent=31 // pred_check_branch
          %299 = sbr.rel (%p297) target = $region44
        $region43: #{_n3_impl.1} parent=31 // pred_region
          %300 = dma.done %s293, 1024
        $region44: #{_n3_impl.1} parent=31 // pred_fallthru
          _
        %s301 = sand.u32 %s48, 1
        %s302 = scalar_lea.sflag [#allocation3], %s301
        %s303 = sand.u32 %s48, 1
        %s304 = smul.addr %s303, 64
        %s305 = scalar_lea.vmem [#allocation2], %s304
        %p306 = pneg %p61
        %p307 = pneg %p58
        %s308 = sand.u32 %s20, 1
        %s309 = scalar_lea.sflag [#allocation5], %s308
        %s310 = sand.u32 %s82, 1
        %s311 = smul.addr %s310, 64
        %s312 = scalar_lea.vmem [#allocation4], %s311
        %p313 = pneg %p95
        %p314 = pneg %p92
        %s315 = sand.u32 %s20, 1
        %s316 = scalar_lea.sflag [#allocation5], %s315
        %s317 = sand.u32 %s116, 1
        %s318 = smul.addr %s317, 64
        %s319 = scalar_lea.vmem [#allocation6], %s318
        %p320 = pneg %p129
        %p321 = pneg %p126
        %p322 = pneg %p155
        %p323 = pneg %p152
        %p324 = scmp.lt.s32.totalorder %s24, 1
        %s325 = scalar_select %p324, %s24, 1
        %s326 = smul.addr %s325, 8
        %s327 = scalar_lea.vmem %s3, %s326
        %s328 = smul.u32 %s24, 2
        %s329 = sadd.s32 %s328, %s25
        %p330 = scmp.lt.s32.totalorder %s329, 2
        %s331 = scalar_select %p330, %s329, 2
        %s332 = smul.u32 8, %s331
        %s333 = ssub.s32 28, %s332
        %p334 = scmp.lt.s32.totalorder %s333, 8
        %s335 = scalar_select %p334, %s333, 8
        %s336 = smul.u32 128, %s335
        %s337 = smul.u32 %s24, 2
        %s338 = sadd.s32 %s337, %s25
        %p339 = scmp.lt.s32.totalorder %s338, 2
        %s340 = scalar_select %p339, %s338, 2
        %s341 = smul.u32 8, %s340
        %s342 = ssub.s32 28, %s341
        %p343 = scmp.lt.s32.totalorder %s342, 8
        %s344 = scalar_select %p343, %s342, 8
        %s345 = smul.u32 128, %s344
        %s346 = smul.u32 %s24, 2
        %s347 = sadd.s32 %s346, %s25
        %p348 = scmp.lt.s32.totalorder %s347, 2
        %s349 = scalar_select %p348, %s347, 2
        %s350 = smul.u32 8, %s349
        %s351 = ssub.s32 28, %s350
        %p352 = scmp.lt.s32.totalorder %s351, 8
        %s353 = scalar_select %p352, %s351, 8
        %s354 = smul.u32 128, %s353
        %p355 = scmp.lt.s32.totalorder %s24, 1
        %s356 = scalar_select %p355, %s24, 1
        %s357 = smul.addr %s356, 8
        %s358 = scalar_lea.vmem %s3, %s357
        %p359 = scmp.eq.s32.totalorder %s25, 0
        // Predicated region
        $region45: #{_n3_impl.1} parent=31 // pred_check
          %p360 = pneg %p359
        $region46: #{_n3_impl.1} parent=31 // pred_check_branch
          %362 = sbr.rel (%p360) target = $region48
        $region47: #{_n3_impl.1} parent=31 // pred_region
          %363 = vst [vmem:[%s358] sm:$0xff] 0.0
        $region48: #{_n3_impl.1} parent=31 // pred_fallthru
          _
        %s364 = smul.u32 %s24, 2
        %s365 = sadd.s32 %s364, %s25
        %p366 = scmp.lt.s32.totalorder %s365, 3
        // Predicated region
        $region49: #{_n3_impl.1} parent=31 // pred_check
          %p367 = pneg %p366
        $region50: #{_n3_impl.1} parent=31 // pred_check_branch
          %369 = sbr.rel (%p367) target = $region52
        $region51: #{_n3_impl.1} parent=31 // pred_region
          %v370 = vld [vmem:[%s358] sm:$0xff]
          %v371 = vld [vmem:[%s278] sm:$0xff]
          %v372 = vld [vmem:[%s278 + $0x8] sm:$0xff]
          %v373 = vld [vmem:[%s278 + $0x10] sm:$0xff]
          %v374 = vld [vmem:[%s278 + $0x18] sm:$0xff]
          %v375 = vld [vmem:[%s278 + $0x20] sm:$0xff]
          %v376 = vld [vmem:[%s278 + $0x28] sm:$0xff]
          %v377 = vld [vmem:[%s278 + $0x30] sm:$0xff]
          %v378 = vld [vmem:[%s278 + $0x38] sm:$0xff]
          %v379 = vand.u32 2147483647, %v371
          %v380 = vand.u32 2147483647, %v372
          %v381 = vand.u32 2147483647, %v373
          %v382 = vand.u32 2147483647, %v374
          %v383 = vand.u32 2147483647, %v375
          %v384 = vand.u32 2147483647, %v376
          %v385 = vand.u32 2147483647, %v377
          %v386 = vand.u32 2147483647, %v378
          %v387 = vmul.f32 %v379, %v379
          %v388 = vmul.f32 %v380, %v380
          %v389 = vmul.f32 %v381, %v381
          %v390 = vmul.f32 %v382, %v382
          %v391 = vmul.f32 %v383, %v383
          %v392 = vmul.f32 %v384, %v384
          %v393 = vmul.f32 %v385, %v385
          %v394 = vmul.f32 %v386, %v386
          %v395 = vmul.f32 %v387, %v379
          %v396 = vmul.f32 %v388, %v380
          %v397 = vmul.f32 %v389, %v381
          %v398 = vmul.f32 %v390, %v382
          %v399 = vmul.f32 %v391, %v383
          %v400 = vmul.f32 %v392, %v384
          %v401 = vmul.f32 %v393, %v385
          %v402 = vmul.f32 %v394, %v386
          %v403 = vadd.f32 %v395, %v396
          %v404 = vadd.f32 %v403, %v397
          %v405 = vadd.f32 %v404, %v398
          %v406 = vadd.f32 %v405, %v399
          %v407 = vadd.f32 %v406, %v400
          %v408 = vadd.f32 %v407, %v401
          %v409 = vadd.f32 %v408, %v402
          %v410 = vadd.f32 %v409, 0.0
          %v411 = vld [vmem:[%s287] sm:$0xff]
          %v412 = vld [vmem:[%s287 + $0x8] sm:$0xff]
          %v413 = vld [vmem:[%s287 + $0x10] sm:$0xff]
          %v414 = vld [vmem:[%s287 + $0x18] sm:$0xff]
          %v415 = vld [vmem:[%s287 + $0x20] sm:$0xff]
          %v416 = vld [vmem:[%s287 + $0x28] sm:$0xff]
          %v417 = vld [vmem:[%s287 + $0x30] sm:$0xff]
          %v418 = vld [vmem:[%s287 + $0x38] sm:$0xff]
          %v419 = vand.u32 2147483647, %v411
          %v420 = vand.u32 2147483647, %v412
          %v421 = vand.u32 2147483647, %v413
          %v422 = vand.u32 2147483647, %v414
          %v423 = vand.u32 2147483647, %v415
          %v424 = vand.u32 2147483647, %v416
          %v425 = vand.u32 2147483647, %v417
          %v426 = vand.u32 2147483647, %v418
          %v427 = vmul.f32 %v419, %v419
          %v428 = vmul.f32 %v420, %v420
          %v429 = vmul.f32 %v421, %v421
          %v430 = vmul.f32 %v422, %v422
          %v431 = vmul.f32 %v423, %v423
          %v432 = vmul.f32 %v424, %v424
          %v433 = vmul.f32 %v425, %v425
          %v434 = vmul.f32 %v426, %v426
          %v435 = vmul.f32 %v427, %v419
          %v436 = vmul.f32 %v428, %v420
          %v437 = vmul.f32 %v429, %v421
          %v438 = vmul.f32 %v430, %v422
          %v439 = vmul.f32 %v431, %v423
          %v440 = vmul.f32 %v432, %v424
          %v441 = vmul.f32 %v433, %v425
          %v442 = vmul.f32 %v434, %v426
          %v443 = vadd.f32 %v435, %v436
          %v444 = vadd.f32 %v443, %v437
          %v445 = vadd.f32 %v444, %v438
          %v446 = vadd.f32 %v445, %v439
          %v447 = vadd.f32 %v446, %v440
          %v448 = vadd.f32 %v447, %v441
          %v449 = vadd.f32 %v448, %v442
          %v450 = vadd.f32 %v410, %v449
          %v451 = vld [vmem:[%s296] sm:$0xff]
          %v452 = vld [vmem:[%s296 + $0x8] sm:$0xff]
          %v453 = vld [vmem:[%s296 + $0x10] sm:$0xff]
          %v454 = vld [vmem:[%s296 + $0x18] sm:$0xff]
          %v455 = vld [vmem:[%s296 + $0x20] sm:$0xff]
          %v456 = vld [vmem:[%s296 + $0x28] sm:$0xff]
          %v457 = vld [vmem:[%s296 + $0x30] sm:$0xff]
          %v458 = vld [vmem:[%s296 + $0x38] sm:$0xff]
          %v459 = vand.u32 2147483647, %v451
          %v460 = vand.u32 2147483647, %v452
          %v461 = vand.u32 2147483647, %v453
          %v462 = vand.u32 2147483647, %v454
          %v463 = vand.u32 2147483647, %v455
          %v464 = vand.u32 2147483647, %v456
          %v465 = vand.u32 2147483647, %v457
          %v466 = vand.u32 2147483647, %v458
          %v467 = vmul.f32 %v459, %v459
          %v468 = vmul.f32 %v460, %v460
          %v469 = vmul.f32 %v461, %v461
          %v470 = vmul.f32 %v462, %v462
          %v471 = vmul.f32 %v463, %v463
          %v472 = vmul.f32 %v464, %v464
          %v473 = vmul.f32 %v465, %v465
          %v474 = vmul.f32 %v466, %v466
          %v475 = vmul.f32 %v467, %v459
          %v476 = vmul.f32 %v468, %v460
          %v477 = vmul.f32 %v469, %v461
          %v478 = vmul.f32 %v470, %v462
          %v479 = vmul.f32 %v471, %v463
          %v480 = vmul.f32 %v472, %v464
          %v481 = vmul.f32 %v473, %v465
          %v482 = vmul.f32 %v474, %v466
          %v483 = vadd.f32 %v475, %v476
          %v484 = vadd.f32 %v483, %v477
          %v485 = vadd.f32 %v484, %v478
          %v486 = vadd.f32 %v485, %v479
          %v487 = vadd.f32 %v486, %v480
          %v488 = vadd.f32 %v487, %v481
          %v489 = vadd.f32 %v488, %v482
          %v490 = vadd.f32 %v450, %v489
          %v491 = vadd.f32 %v370, %v490
          %492 = vst [vmem:[%s358] sm:$0xff] %v491
        $region52: #{_n3_impl.1} parent=31 // pred_fallthru
          _
        %p493 = scmp.lt.s32.totalorder %s24, 1
        %s494 = scalar_select %p493, %s24, 1
        %s495 = smul.addr %s494, 8
        %s496 = scalar_lea.vmem %s3, %s495
        // Predicated region
        $region53: #{_n3_impl.1} parent=31 // pred_check
          %p497 = pneg %p152
        $region54: #{_n3_impl.1} parent=31 // pred_check_branch
          %499 = sbr.rel (%p497) target = $region56
        $region55: #{_n3_impl.1} parent=31 // pred_region
          _
        $region56: #{_n3_impl.1} parent=31 // pred_fallthru
          _
      $region32: #{_n3_impl.1} parent=5 // pred_fallthru
        _
      %p500 = scmp.le.s32.totalorder 2, %s15
      // Predicated region
      $region57: #{_n3_impl.1} parent=5 // pred_check
        %p501 = pneg %p500
      $region58: #{_n3_impl.1} parent=5 // pred_check_branch
        %503 = sbr.rel (%p501) target = $region60
      $region59: #{_n3_impl.1} parent=5 // pred_region
        %s504 = ssub.s32 %s15, 2
        // Predicated region
        $region61: #{_n3_impl.1} parent=59 // pred_check
          %p505 = pneg %p158
        $region62: #{_n3_impl.1} parent=59 // pred_check_branch
          %507 = sbr.rel (%p505) target = $region64
        $region63: #{_n3_impl.1} parent=59 // pred_region
          %p508 = scmp.lt.s32.totalorder %s26, 1
          %s509 = scalar_select %p508, %s26, 1
          %s510 = smul.addr %s509, 8
          %s511 = scalar_lea.vmem %s3, %s510
        $region64: #{_n3_impl.1} parent=59 // pred_fallthru
          _
      $region60: #{_n3_impl.1} parent=5 // pred_fallthru
        _
    $region6: #{_n3_impl.1} parent=1 // loop_footer
      %s19 = sadd.s32 1, %s15
    $region7: #{_n3_impl.1} parent=1 // loop_footer_branch
      %14 = sbr.rel target = $region3
    $region8: #{_n3_impl.1} parent=1 // loop_exit
      _
    %512 = vsyncpa [#allocation3], 1
    %s513 = scalar_lea.sflag [#allocation3], 1
    %514 = vsyncpa %s513, 1
    %515 = vsyncpa [#allocation5], 1
    %s516 = scalar_lea.sflag [#allocation5], 1
    %517 = vsyncpa %s516, 1

</llo_original>
